<compile_context>
chip_gen: v7x
topology: tpu7x:2x2x1
jax: 0.10.0
libtpu: 0.0.40
codegen_flags: <defaults>
</compile_context>

<pallas_src>
import jax
import jax.numpy as jnp
from jax.experimental import pallas as pl
from jax.experimental.pallas import tpu as pltpu


def _model_kernel(b_ref, out_ref):
    # b_ref: (1, 3, 1, 80) f32 — permute/view-shuffled input, pre-expanded so
    # everything in-kernel is pointwise or a size-1-dim broadcast.
    b = b_ref[...]

    # y = x.view(3,80).permute(1,0).tanh().t().tanh().permute(1,0).view(3,80)
    # -> two tanh passes (the layout shuffles commute with pointwise tanh).
    w = jnp.tanh(jnp.tanh(b))

    # z = cat((y, y), dim=0); z.shape[0] == 6 != 2, so the else branch
    # z.reshape(2, 10) would run, which is numerically impossible (480 -> 20).
    # TODO(synk): z.reshape(2, 10) has no valid interpretation; it is skipped.
    w = jnp.maximum(w, 0.0)                       # torch.relu(z)

    # x = cat((z, z), last dim); y = x.tanh(); z = y.view(-1).tanh()
    # (cats only duplicate data, so both tanhs commute through to w).
    w = jnp.tanh(jnp.tanh(w))

    # Both concatenations replicate identical data ("sink cat after pointwise"):
    # one leading-dim + sublane broadcast store; every written row starts at
    # lane offset 0, single store issue, no XLU lane rotates.
    out_ref[...] = jnp.broadcast_to(w, (2, 3, 2, 80))


_pallas_forward = pl.pallas_call(
    _model_kernel,
    out_shape=jax.ShapeDtypeStruct((2, 3, 2, 80), jnp.float32),
    in_specs=[pl.BlockSpec(memory_space=pltpu.MemorySpace.VMEM)],
    out_specs=pl.BlockSpec(memory_space=pltpu.MemorySpace.VMEM),
    compiler_params=pltpu.CompilerParams(allow_input_fusion=[True]),
    cost_estimate=pl.CostEstimate(
        flops=1200, transcendentals=960, bytes_accessed=4800),
)


@jax.jit
def model_forward(x):
    # x.view(3, 80): free row-major reinterpretation.
    a = jnp.reshape(x, (3, 80)).astype(jnp.float32)
    # permute(1,0) . t() . permute(1,0) . view(3,80) collapses to a single
    # transpose followed by a row-major reshape; expanded to (1, 3, 1, 80)
    # (free) so the kernel never reshapes and the tiled output broadcasts
    # from the size-1 dims.  Under jit + allow_input_fusion this producer may
    # fuse straight into the Mosaic call.
    # TODO(synk): PyTorch's .view on the non-contiguous transpose would raise;
    # reshape (row-major) semantics are substituted.
    b = jnp.reshape(jnp.transpose(a), (1, 3, 1, 80))

    out4d = _pallas_forward(b)

    # (2, 3, 2, 80) row-major flatten == flatten of the (6, 160) double-cat
    # result; final y.view(-1).tanh()'s tanh was already applied in-kernel.
    return jnp.reshape(out4d, (-1,))


if __name__ == "__main__":
    key = jax.random.PRNGKey(0)
    # 240 elements so that view(3, 80) is valid (the module's global
    # x = randn(2, 3, 10) could never satisfy its own view).
    x = jax.random.normal(key, (2, 3, 40), dtype=jnp.float32)

    out = model_forward(x)
    out = jax.block_until_ready(out)
    assert out.shape == (960,), out.shape
    assert out.dtype == jnp.float32

    # sanity check against a pure-JAX reference of the same semantics
    a = jnp.reshape(x, (3, 80))
    b = jnp.reshape(jnp.transpose(a), (3, 80))
    w = jnp.tanh(jnp.tanh(jnp.maximum(jnp.tanh(jnp.tanh(b)), 0.0)))
    z = jnp.concatenate([w, w], axis=0)            # cat dim=0 -> (6, 80)
    ref = jnp.reshape(jnp.concatenate([z, z], axis=1), (-1,))  # cat last dim -> flatten
    assert jnp.allclose(out, ref, atol=1e-5), float(jnp.max(jnp.abs(out - ref)))

    print("KERNEL_OK")
</pallas_src>

<mosaic_0001>
module attributes {stable_mosaic.version = 11 : i64} {
  func.func @_model_kernel(%arg0: memref<1x3x1x80xf32, #tpu.memory_space<vmem>>, %arg1: memref<2x3x2x80xf32, #tpu.memory_space<vmem>>) attributes {dimension_semantics = [], scalar_prefetch = 0 : i64, scratch_operands = 0 : i64, tpu.core_type = #tpu.core_type<tc>} {
    %c0 = arith.constant 0 : index
    %c0_0 = arith.constant 0 : index
    %c0_1 = arith.constant 0 : index
    %c0_2 = arith.constant 0 : index
    %0 = vector.load %arg0[%c0, %c0_0, %c0_1, %c0_2] : memref<1x3x1x80xf32, #tpu.memory_space<vmem>>, vector<1x3x1x80xf32>
    %1 = math.tanh %0 : vector<1x3x1x80xf32>
    %2 = math.tanh %1 : vector<1x3x1x80xf32>
    %cst = arith.constant 0.000000e+00 : f32
    %3 = vector.broadcast %cst : f32 to vector<1x3x1x80xf32>
    %4 = arith.maximumf %2, %3 : vector<1x3x1x80xf32>
    %5 = math.tanh %4 : vector<1x3x1x80xf32>
    %6 = math.tanh %5 : vector<1x3x1x80xf32>
    %7 = vector.shape_cast %6 : vector<1x3x1x80xf32> to vector<1x3x1x80xf32>
    %8 = vector.broadcast %7 : vector<1x3x1x80xf32> to vector<2x3x2x80xf32>
    %c0_3 = arith.constant 0 : index
    %c0_4 = arith.constant 0 : index
    %c0_5 = arith.constant 0 : index
    %c0_6 = arith.constant 0 : index
    %9 = vector.load %arg1[%c0_3, %c0_4, %c0_5, %c0_6] : memref<2x3x2x80xf32, #tpu.memory_space<vmem>>, vector<2x3x2x80xf32>
    tpu.vector_store %arg1[%c0_3, %c0_4, %c0_5, %c0_6], %8 {strides = array<i32>} : memref<2x3x2x80xf32, #tpu.memory_space<vmem>>, vector<2x3x2x80xf32>,
    return
  }
}

</mosaic_0001>

<llo_original>
// kernel: model_forward.1
$region0: #{model_forward.1}
  #allocation0 [shape = 'u32[]', space=smem, size = 0x4, offset = 0x4, fixed_abs, tag = 'smem constant byte address 0x4 - core index']
  #allocation1 [shape = 'u32[144,128]{1,0:T(1,128)}', space=vmem, size = 0x12000, scoped, tag = 'internal scratch']
  %s0 = inlined_call_operand.vmem [shape: f32[1,3,1,80], index: 0, kind: input, shape index: {}]
  %s1 = inlined_call_operand.vmem [shape: f32[2,3,2,80], index: 1, kind: output, shape index: {}]
  %s2 = sld [smem:[#allocation0]]
  $region14: #{model_forward.1} parent=0
    _
  %s4 = ssub.s32 1, %s2
  %s5 = scalar_select 0, %s4, %s2
  // Predicated region
  $region2: #{model_forward.1} parent=0 // pred_check
    _
  $region3: #{model_forward.1} parent=0 // pred_check_branch
    %7 = sbr.rel (0) target = $region5
  $region4: #{model_forward.1} parent=0 // pred_region
    _
  $region5: #{model_forward.1} parent=0 // pred_fallthru
    _
  %v8 = vld [vmem:[%s0] sm:$0x1]
  %v9 = vld [vmem:[%s0 + $0x1] sm:$0x1]
  %v10 = vld [vmem:[%s0 + $0x2] sm:$0x1]
  %v11 = vtanh.pop %v8
  %v12 = vtanh.pop %v9
  %v13 = vtanh.pop %v10
  %v14 = vtanh.pop %v11
  %v15 = vtanh.pop %v12
  %v16 = vtanh.pop %v13
  %v17 = vmax.f32 %v14, 0.0
  %v18 = vmax.f32 %v15, 0.0
  %v19 = vmax.f32 %v16, 0.0
  %v20 = vtanh.pop %v17
  %v21 = vtanh.pop %v18
  %v22 = vtanh.pop %v19
  %v23 = vtanh.pop %v20
  %v24 = vtanh.pop %v21
  %v25 = vtanh.pop %v22
  %v29 = vlaneseq
  %v30 = vshrl.u32 %v29, 7
  %v31 = vsub.s32 0, %v30
  %v32 = vrot.slane %v23, %v31
  %v33 = vlaneseq
  %v34 = vshrl.u32 %v33, 7
  %v35 = vsub.s32 0, %v34
  %v36 = vrot.slane %v24, %v35
  %v37 = vlaneseq
  %v38 = vshrl.u32 %v37, 7
  %v39 = vsub.s32 0, %v38
  %v40 = vrot.slane %v25, %v39
  %vm44 = vcmask 648192
  %45 = vst.msk [vmem:[%s1] sm:$0x3] %vm44, %v32
  %46 = vst.msk [vmem:[%s1 + $0x2] sm:$0x3] %vm44, %v36
  %47 = vst.msk [vmem:[%s1 + $0x4] sm:$0x3] %vm44, %v40
  %48 = vst.msk [vmem:[%s1 + $0x6] sm:$0x3] %vm44, %v32
  %49 = vst.msk [vmem:[%s1 + $0x8] sm:$0x3] %vm44, %v36
  %50 = vst.msk [vmem:[%s1 + $0xa] sm:$0x3] %vm44, %v40
  // Predicated region
  $region6: #{model_forward.1} parent=0 // pred_check
    _
  $region7: #{model_forward.1} parent=0 // pred_check_branch
    %52 = sbr.rel (0) target = $region9
  $region8: #{model_forward.1} parent=0 // pred_region
    _
  $region9: #{model_forward.1} parent=0 // pred_fallthru
    _
  // Predicated region
  $region10: #{model_forward.1} parent=0 // pred_check
    _
  $region11: #{model_forward.1} parent=0 // pred_check_branch
    %54 = sbr.rel (0) target = $region13
  $region12: #{model_forward.1} parent=0 // pred_region
    _
  $region13: #{model_forward.1} parent=0 // pred_fallthru
    _

</llo_original>
